<compile_context>
chip_gen: v7x
topology: tpu7x:2x2x1
jax: 0.10.0
libtpu: 0.0.40
codegen_flags: <defaults>
</compile_context>

<pallas_src>
import jax
import jax.numpy as jnp
from jax.experimental import pallas as pl
from jax.experimental.pallas import tpu as pltpu


POS_MULTIPLIER = 2.0
NEG_MULTIPLIER = -2.0
CLIP_MIN = -8.0
CLIP_MAX = 8.0


def _sciu_kernel(x_ref, o_ref):
    x = x_ref[...]
    sq = x * x  # computed in the input dtype, matching the torch reference
    y = jnp.where(x > 0, POS_MULTIPLIER * sq, NEG_MULTIPLIER * sq)
    o_ref[...] = jnp.clip(y, CLIP_MIN, CLIP_MAX).astype(o_ref.dtype)


def _round_up(v: int, m: int) -> int:
    return ((v + m - 1) // m) * m


def _choose_lanes(n: int):
    """Widest lane extent (multiple of 128) that divides n; else pad to 512."""
    for lanes in (1024, 512, 256, 128):
        if n % lanes == 0:
            return lanes, False
    # Non-divisible: pad to a 512-lane multiple (<= 511 extra elements) so we
    # still get a wide lane-dense layout without a full-block worth of padding.
    return 512, True


def sciu(x: jax.Array, *, target_block_bytes: int = 2 * 1024 * 1024) -> jax.Array:
    """Applies SCiU elementwise. Accepts any shape; preserves shape & dtype."""
    orig_shape = x.shape
    orig_dtype = x.dtype
    n = int(x.size)
    if n == 0:
        return x
    itemsize = jnp.dtype(orig_dtype).itemsize

    # --- Path 1: tiny tensors -> single full-extent block, no grid, no pad ---
    small_elems = (128 * 1024) // itemsize  # <= 128 KiB of data
    if n <= small_elems:
        if n % 128 == 0:
            small_shape = (n // 128, 128)
        else:
            small_shape = (1, n)  # full-extent block bypasses (8,128) rule
        out = pl.pallas_call(
            _sciu_kernel,
            out_shape=jax.ShapeDtypeStruct(small_shape, orig_dtype),
        )(x.reshape(small_shape))
        return out.reshape(orig_shape)

    # --- Path 2: streaming tiled path --------------------------------------
    lanes, needs_pad = _choose_lanes(n)
    flat = x.reshape(-1)
    if needs_pad:
        # Pad only to lane granularity, never to a full block.
        n_pad = _round_up(n, lanes)
        flat = jnp.pad(flat, (0, n_pad - n))
    else:
        n_pad = n

    rows = n_pad // lanes
    x2d = flat.reshape(rows, lanes)

    # ~target_block_bytes per block, rows rounded to a sublane multiple (8).
    target_rows = max(8, ((target_block_bytes // itemsize) // lanes) // 8 * 8)
    tile_rows = min(target_rows, _round_up(rows, 8))
    grid_n = pl.cdiv(rows, tile_rows)
    if grid_n == 1 and rows > 8:
        # Split into (at least) 2 steps so both v7x TensorCores get work and
        # the input/output DMAs of neighbouring steps overlap with compute.
        tile_rows = _round_up(pl.cdiv(rows, 2), 8)
        grid_n = pl.cdiv(rows, tile_rows)

    out2d = pl.pallas_call(
        _sciu_kernel,
        out_shape=jax.ShapeDtypeStruct((rows, lanes), orig_dtype),
        grid=(grid_n,),
        in_specs=[pl.BlockSpec((tile_rows, lanes), lambda i: (i, 0))],
        out_specs=pl.BlockSpec((tile_rows, lanes), lambda i: (i, 0)),
        compiler_params=pltpu.CompilerParams(
            dimension_semantics=("parallel",),
        ),
    )(x2d)

    out_flat = out2d.reshape(-1)
    if n_pad != n:
        out_flat = out_flat[:n]
    return out_flat.reshape(orig_shape)


def sciu_ref(x: jax.Array) -> jax.Array:
    sq = jnp.square(x)
    y = jnp.where(x > 0, POS_MULTIPLIER * sq, NEG_MULTIPLIER * sq)
    return jnp.clip(y, CLIP_MIN, CLIP_MAX)


if __name__ == "__main__":
    k0, k1, k2 = jax.random.split(jax.random.PRNGKey(0), 3)

    # Primary: NCHW input matching the module spec (small path).
    x = jax.random.normal(k0, (2, 4, 16, 16), dtype=jnp.float32) * 3.0
    y = sciu(x)
    jax.block_until_ready(y)
    y_ref = sciu_ref(x)
    assert y.shape == x.shape and y.dtype == x.dtype
    assert jnp.allclose(y, y_ref, atol=1e-6, rtol=1e-6)

    # Tiled path, lane count divisible (wide lanes, no padding).
    x2 = jax.random.normal(k1, (8, 16, 32, 32), dtype=jnp.float32) * 3.0
    y2 = sciu(x2)
    jax.block_until_ready(y2)
    assert jnp.allclose(y2, sciu_ref(x2), atol=1e-6, rtol=1e-6)

    # Tiled path with a non-128-divisible element count (minimal padding).
    x3 = jax.random.normal(k2, (5, 13, 29, 23), dtype=jnp.float32) * 3.0
    y3 = sciu(x3)
    jax.block_until_ready(y3)
    assert y3.shape == x3.shape and y3.dtype == x3.dtype
    assert jnp.allclose(y3, sciu_ref(x3), atol=1e-6, rtol=1e-6)

    # Dtype preservation check (bf16, tiled path).
    x4 = (jax.random.normal(k0, (4, 8, 64, 64), dtype=jnp.float32) * 3.0).astype(jnp.bfloat16)
    y4 = sciu(x4)
    jax.block_until_ready(y4)
    assert y4.dtype == jnp.bfloat16 and y4.shape == x4.shape
    assert jnp.allclose(y4.astype(jnp.float32), sciu_ref(x4).astype(jnp.float32),
                        atol=1e-1, rtol=1e-2)

    print("KERNEL_OK")
</pallas_src>

<mosaic_0001>
module attributes {stable_mosaic.version = 11 : i64} {
  func.func @_sciu_kernel(%arg0: memref<16x128xf32, #tpu.memory_space<vmem>>, %arg1: memref<16x128xf32, #tpu.memory_space<vmem>>) attributes {dimension_semantics = [], scalar_prefetch = 0 : i64, scratch_operands = 0 : i64, tpu.core_type = #tpu.core_type<tc>} {
    %c0 = arith.constant 0 : index
    %c0_0 = arith.constant 0 : index
    %0 = vector.load %arg0[%c0, %c0_0] : memref<16x128xf32, #tpu.memory_space<vmem>>, vector<16x128xf32>
    %1 = arith.mulf %0, %0 : vector<16x128xf32>
    %cst = arith.constant 0.000000e+00 : f32
    %2 = vector.broadcast %cst : f32 to vector<16x128xf32>
    %3 = arith.cmpf ogt, %0, %2 : vector<16x128xf32>
    %cst_1 = arith.constant 2.000000e+00 : f32
    %4 = vector.broadcast %cst_1 : f32 to vector<16x128xf32>
    %5 = arith.mulf %4, %1 : vector<16x128xf32>
    %cst_2 = arith.constant -2.000000e+00 : f32
    %6 = vector.broadcast %cst_2 : f32 to vector<16x128xf32>
    %7 = arith.mulf %6, %1 : vector<16x128xf32>
    %8 = arith.select %3, %5, %7 : vector<16x128xi1>, vector<16x128xf32>
    %cst_3 = arith.constant -8.000000e+00 : f32
    %cst_4 = arith.constant 8.000000e+00 : f32
    %9 = vector.broadcast %cst_3 : f32 to vector<16x128xf32>
    %10 = arith.maximumf %9, %8 : vector<16x128xf32>
    %11 = vector.broadcast %cst_4 : f32 to vector<16x128xf32>
    %12 = arith.minimumf %11, %10 : vector<16x128xf32>
    %c0_5 = arith.constant 0 : index
    %c0_6 = arith.constant 0 : index
    %13 = vector.load %arg1[%c0_5, %c0_6] : memref<16x128xf32, #tpu.memory_space<vmem>>, vector<16x128xf32>
    tpu.vector_store %arg1[%c0_5, %c0_6], %12 {strides = array<i32>} : memref<16x128xf32, #tpu.memory_space<vmem>>, vector<16x128xf32>,
    return
  }
}

</mosaic_0001>

<llo_original>
// kernel: tpu_custom_call.1
$region0: #{tpu_custom_call.1}
  #allocation0 [shape = 'u32[]', space=smem, size = 0x4, offset = 0x4, fixed_abs, tag = 'smem constant byte address 0x4 - core index']
  #allocation1 [shape = 'u32[144,128]{1,0:T(1,128)}', space=vmem, size = 0x12000, scoped, tag = 'internal scratch']
  %s0 = inlined_call_operand.hbm [shape: f32[16,128], index: 0, kind: input, shape index: {}]
  %s1 = inlined_call_operand.hbm [shape: f32[16,128], index: 1, kind: output, shape index: {}]
  %s2 = sld [smem:[#allocation0]]
  $region18: #{tpu_custom_call.1} parent=0
    _
  %s4 = ssub.s32 1, %s2
  %s5 = scalar_select 0, %s4, %s2
  $region1: #{tpu_custom_call.1} parent=0
    #allocation2 [shape = 'u8[8192]{0}', space=vmem, size = 0x2000, scoped, tag = 'input window, operand 0, single buffered']
    #allocation3 [shape = 's32[1]{0}', space=sflag, size = 0x4, scoped, tag = 'scoped memory for tpu_custom_call.1']
    #allocation4 [shape = 's32[1]{0}', space=sflag, size = 0x4, scoped, tag = 'scoped memory for tpu_custom_call.1']
    #allocation5 [shape = 'u8[8192]{0}', space=vmem, size = 0x2000, scoped, tag = 'output window, operand 0, single buffered']
    %6 = vsyncpa [#allocation3], 0
    %7 = vsyncpa [#allocation4], 0
    // Predicated region
    $region2: #{tpu_custom_call.1} parent=1 // pred_check
      _
    $region3: #{tpu_custom_call.1} parent=1 // pred_check_branch
      %9 = sbr.rel (0) target = $region5
    $region4: #{tpu_custom_call.1} parent=1 // pred_region
      %s11 = ssub.s32 256, 256
      %12 = vsyncadd [#allocation3], %s11
      %s13 = sshll.u32 [#allocation2], 4
      %s14 = int_to_ptr.vmem [resolvable:$true] %s13
      %19 = dma.hbm_to_vmem [thread:$0]  %s0, 256, %s14, [#allocation3], 128, 128, 8
    $region5: #{tpu_custom_call.1} parent=1 // pred_fallthru
      _
    // Predicated region
    $region6: #{tpu_custom_call.1} parent=1 // pred_check
      _
    $region7: #{tpu_custom_call.1} parent=1 // pred_check_branch
      %21 = sbr.rel (0) target = $region9
    $region8: #{tpu_custom_call.1} parent=1 // pred_region
      %22 = dma.done [#allocation3], 256
    $region9: #{tpu_custom_call.1} parent=1 // pred_fallthru
      _
    %v23 = vld [vmem:[#allocation2] sm:$0xff]
    %v24 = vld [vmem:[#allocation2 + $0x8] sm:$0xff]
    %v25 = vmul.f32 %v23, %v23
    %v26 = vmul.f32 %v24, %v24
    %vm27 = vcmp.gt.f32.partialorder %v23, 0.0
    %vm28 = vcmp.gt.f32.partialorder %v24, 0.0
    %v29 = vmul.f32 %v25, 2.0
    %v30 = vmul.f32 %v26, 2.0
    %v31 = vmul.f32 %v25, -2.0
    %v32 = vmul.f32 %v26, -2.0
    %v33 = vsel %vm27, %v29, %v31
    %v34 = vsel %vm28, %v30, %v32
    %v35 = vmax.f32 %v33, -8.0
    %v36 = vmax.f32 %v34, -8.0
    %v37 = vmin.f32 %v35, 8.0
    %v38 = vmin.f32 %v36, 8.0
    %39 = vst [vmem:[#allocation5] sm:$0xff] %v37
    %40 = vst [vmem:[#allocation5 + $0x8] sm:$0xff] %v38
    // Predicated region
    $region10: #{tpu_custom_call.1} parent=1 // pred_check
      _
    $region11: #{tpu_custom_call.1} parent=1 // pred_check_branch
      %42 = sbr.rel (0) target = $region13
    $region12: #{tpu_custom_call.1} parent=1 // pred_region
      %s44 = ssub.s32 256, 256
      %45 = vsyncadd [#allocation4], %s44
      %s46 = sshll.u32 [#allocation5], 4
      %s47 = int_to_ptr.vmem [resolvable:$true] %s46
      %52 = dma.vmem_to_hbm [thread:$0]  %s47, 256, %s1, [#allocation4], 128, 128, 8
    $region13: #{tpu_custom_call.1} parent=1 // pred_fallthru
      _
    // Predicated region
    $region14: #{tpu_custom_call.1} parent=1 // pred_check
      _
    $region15: #{tpu_custom_call.1} parent=1 // pred_check_branch
      %54 = sbr.rel (0) target = $region17
    $region16: #{tpu_custom_call.1} parent=1 // pred_region
      %55 = dma.done [#allocation4], 256
    $region17: #{tpu_custom_call.1} parent=1 // pred_fallthru
      _
    %56 = vsyncpa [#allocation3], 1
    %57 = vsyncpa [#allocation4], 1

</llo_original>
